<compile_context>
chip_gen: v7x
topology: tpu7x:2x2x1
jax: 0.10.0
libtpu: 0.0.40
codegen_flags: <defaults>
</compile_context>

<pallas_src>
import functools

import jax
import jax.numpy as jnp
from jax.experimental import pallas as pl
from jax.experimental.pallas import tpu as pltpu


def _round_up(x, m):
    return ((x + m - 1) // m) * m


def _sigmoid(x):
    # EUP tanh instead of exp + VPU divide.
    return 0.5 * (jnp.tanh(0.5 * x) + 1.0)


def rbm_kernel(v_ref, wt_ref, w_ref, hb_ref, vb_ref, uh_ref, uv_ref,
               vgibb_ref, *, k):
    """One batch tile of the whole Gibbs chain.

    v_ref   : (tb, n_vis_p)        bf16   visible tile
    wt_ref  : (n_vis_p, n_hid_p)   bf16   W^T (pinned across grid)
    w_ref   : (n_hid_p, n_vis_p)   bf16   W   (pinned across grid)
    hb_ref  : (1, n_hid_p)         f32
    vb_ref  : (1, n_vis_p)         f32
    uh_ref  : (k+1, tb, n_hid_p)   f32    pre-drawn uniforms for hidden samples
    uv_ref  : (k,   tb, n_vis_p)   f32    pre-drawn uniforms for visible samples
    """
    v = v_ref[...]
    WT = wt_ref[...]
    W = w_ref[...]

    tb = v.shape[0]
    n_hid_p = WT.shape[1]
    n_vis_p = W.shape[1]

    # Hoist bias broadcasts out of the (unrolled) Gibbs loop.
    hb_b = jnp.broadcast_to(hb_ref[...], (tb, n_hid_p))
    vb_b = jnp.broadcast_to(vb_ref[...], (tb, n_vis_p))

    def visible_to_hidden(vis_bf, u):
        # F.linear(v, W, h_bias) == v @ W.T + h_bias   (W^T pre-hoisted)
        logits = jnp.dot(vis_bf, WT, preferred_element_type=jnp.float32) + hb_b
        p = _sigmoid(logits)
        return (u < p).astype(jnp.bfloat16)          # exact {0,1} in bf16

    def hidden_to_visible(hid_bf, u):
        # F.linear(h, W.t(), v_bias) == h @ W + v_bias
        logits = jnp.dot(hid_bf, W, preferred_element_type=jnp.float32) + vb_b
        p = _sigmoid(logits)
        return (u < p).astype(jnp.bfloat16)

    h = visible_to_hidden(v, uh_ref[0])
    v_gibb = h  # overwritten below; wrapper asserts k >= 1
    # TODO(synk): for large k switch this static unroll to lax.fori_loop with
    # dynamic indexing into uh_ref / uv_ref (chain is strictly serial anyway).
    for step in range(k):
        v_gibb = hidden_to_visible(h, uv_ref[step])
        h = visible_to_hidden(v_gibb, uh_ref[step + 1])

    vgibb_ref[...] = v_gibb.astype(vgibb_ref.dtype)


def rbm_forward(v, W, h_bias, v_bias, key, *, k=1, tile_b=256):
    """Returns (v, v_gibb) with the same semantics as RBM_v1.forward."""
    assert k >= 1, "k must be >= 1 (matches PyTorch forward semantics)"
    B, n_vis = v.shape
    n_hid = W.shape[0]
    assert W.shape == (n_hid, n_vis)

    h_bias = jnp.reshape(h_bias, (1, n_hid)).astype(jnp.float32)
    v_bias = jnp.reshape(v_bias, (1, n_vis)).astype(jnp.float32)

    # ---- lane/sublane-friendly padding (zero weights => padding is inert) ----
    n_vis_p = _round_up(n_vis, 128)
    n_hid_p = _round_up(n_hid, 128)
    tile_b = _round_up(max(8, min(tile_b, B)), 8)
    B_p = _round_up(B, tile_b)

    v_p = jnp.zeros((B_p, n_vis_p), jnp.float32).at[:B, :n_vis].set(
        v.astype(jnp.float32))
    W_p = jnp.zeros((n_hid_p, n_vis_p), jnp.float32).at[:n_hid, :n_vis].set(
        W.astype(jnp.float32))
    hb_p = jnp.zeros((1, n_hid_p), jnp.float32).at[:, :n_hid].set(h_bias)
    vb_p = jnp.zeros((1, n_vis_p), jnp.float32).at[:, :n_vis].set(v_bias)

    # bf16 MXU operands; W^T hoisted exactly once here (not per Gibbs step).
    v_bf = v_p.astype(jnp.bfloat16)
    W_bf = W_p.astype(jnp.bfloat16)
    WT_bf = W_p.T.astype(jnp.bfloat16)

    # Pre-drawn Bernoulli uniforms: independent per batch row / grid tile.
    k_h, k_v = jax.random.split(key)
    u_h = jax.random.uniform(k_h, (k + 1, B_p, n_hid_p), jnp.float32)
    u_v = jax.random.uniform(k_v, (k, B_p, n_vis_p), jnp.float32)

    grid = (B_p // tile_b,)
    kernel = functools.partial(rbm_kernel, k=k)

    v_gibb_p = pl.pallas_call(
        kernel,
        out_shape=jax.ShapeDtypeStruct((B_p, n_vis_p), jnp.float32),
        grid=grid,
        in_specs=[
            pl.BlockSpec((tile_b, n_vis_p), lambda i: (i, 0)),           # v tile
            pl.BlockSpec((n_vis_p, n_hid_p), lambda i: (0, 0)),          # W^T
            pl.BlockSpec((n_hid_p, n_vis_p), lambda i: (0, 0)),          # W
            pl.BlockSpec((1, n_hid_p), lambda i: (0, 0)),                # h_bias
            pl.BlockSpec((1, n_vis_p), lambda i: (0, 0)),                # v_bias
            pl.BlockSpec((k + 1, tile_b, n_hid_p), lambda i: (0, i, 0)), # u_h
            pl.BlockSpec((k, tile_b, n_vis_p), lambda i: (0, i, 0)),     # u_v
        ],
        out_specs=pl.BlockSpec((tile_b, n_vis_p), lambda i: (i, 0)),
        compiler_params=pltpu.CompilerParams(
            dimension_semantics=("parallel",)),
    )(v_bf, WT_bf, W_bf, hb_p, vb_p, u_h, u_v)

    # First output is the untouched visible input -> return it from the wrapper
    # instead of copying it through the kernel.
    return v, v_gibb_p[:B, :n_vis]


if __name__ == "__main__":
    # Small shapes consistent with the module (defaults n_vis=784, n_hid=128,
    # k=1; scaled-down n_vis here).
    B, n_vis, n_hid, k = 8, 256, 128, 1

    key = jax.random.PRNGKey(0)
    k_w, k_hb, k_vb, k_x, k_noise = jax.random.split(key, 5)

    # Parameter init mirroring torch.randn in __init__.
    W = jax.random.normal(k_w, (n_hid, n_vis), dtype=jnp.float32)
    h_bias = jax.random.normal(k_hb, (1, n_hid), dtype=jnp.float32)
    v_bias = jax.random.normal(k_vb, (1, n_vis), dtype=jnp.float32)

    # Visible input (e.g. pixel intensities in [0, 1)).
    x = jax.random.uniform(k_x, (B, n_vis), dtype=jnp.float32)

    v_out, v_gibb = rbm_forward(x, W, h_bias, v_bias, k_noise, k=k)
    jax.block_until_ready((v_out, v_gibb))

    assert v_out.shape == (B, n_vis) and v_gibb.shape == (B, n_vis)
    # v_gibb is a Bernoulli sample -> must be {0, 1}
    assert bool(jnp.all((v_gibb == 0.0) | (v_gibb == 1.0)))
    # first output is the untouched visible input
    assert bool(jnp.allclose(v_out, x))

    print("KERNEL_OK")
</pallas_src>

<mosaic_0001>
module attributes {stable_mosaic.version = 11 : i64} {
  func.func @rbm_kernel(%arg0: i32, %arg1: memref<8x256xbf16, #tpu.memory_space<vmem>>, %arg2: memref<256x128xbf16, #tpu.memory_space<vmem>>, %arg3: memref<128x256xbf16, #tpu.memory_space<vmem>>, %arg4: memref<1x128xf32, #tpu.memory_space<vmem>>, %arg5: memref<1x256xf32, #tpu.memory_space<vmem>>, %arg6: memref<2x8x128xf32, #tpu.memory_space<vmem>>, %arg7: memref<1x8x256xf32, #tpu.memory_space<vmem>>, %arg8: memref<8x256xf32, #tpu.memory_space<vmem>>) attributes {dimension_semantics = [#tpu.dimension_semantics<parallel>], iteration_bounds = array<i64: 1>, scalar_prefetch = 0 : i64, scratch_operands = 0 : i64, tpu.core_type = #tpu.core_type<tc>, window_params = [{transform_indices = @transform_0, window_bounds = array<i64: 8, 256>}, {pipeline_mode = #tpu.pipeline_mode<synchronous>, transform_indices = @transform_1, window_bounds = array<i64: 256, 128>}, {pipeline_mode = #tpu.pipeline_mode<synchronous>, transform_indices = @transform_2, window_bounds = array<i64: 128, 256>}, {pipeline_mode = #tpu.pipeline_mode<synchronous>, transform_indices = @transform_3, window_bounds = array<i64: 1, 128>}, {pipeline_mode = #tpu.pipeline_mode<synchronous>, transform_indices = @transform_4, window_bounds = array<i64: 1, 256>}, {transform_indices = @transform_5, window_bounds = array<i64: 2, 8, 128>}, {transform_indices = @transform_6, window_bounds = array<i64: 1, 8, 256>}, {transform_indices = @transform_7, window_bounds = array<i64: 8, 256>}]} {
    %c0 = arith.constant 0 : index
    %c0_0 = arith.constant 0 : index
    %0 = vector.load %arg1[%c0, %c0_0] : memref<8x256xbf16, #tpu.memory_space<vmem>>, vector<8x256xbf16>
    %c0_1 = arith.constant 0 : index
    %c0_2 = arith.constant 0 : index
    %1 = vector.load %arg2[%c0_1, %c0_2] : memref<256x128xbf16, #tpu.memory_space<vmem>>, vector<256x128xbf16>
    %c0_3 = arith.constant 0 : index
    %c0_4 = arith.constant 0 : index
    %2 = vector.load %arg3[%c0_3, %c0_4] : memref<128x256xbf16, #tpu.memory_space<vmem>>, vector<128x256xbf16>
    %c0_5 = arith.constant 0 : index
    %c0_6 = arith.constant 0 : index
    %3 = vector.load %arg4[%c0_5, %c0_6] : memref<1x128xf32, #tpu.memory_space<vmem>>, vector<1x128xf32>
    %4 = vector.shape_cast %3 : vector<1x128xf32> to vector<1x128xf32>
    %5 = vector.broadcast %4 : vector<1x128xf32> to vector<8x128xf32>
    %c0_7 = arith.constant 0 : index
    %c0_8 = arith.constant 0 : index
    %6 = vector.load %arg5[%c0_7, %c0_8] : memref<1x256xf32, #tpu.memory_space<vmem>>, vector<1x256xf32>
    %7 = vector.shape_cast %6 : vector<1x256xf32> to vector<1x256xf32>
    %8 = vector.broadcast %7 : vector<1x256xf32> to vector<8x256xf32>
    %c0_9 = arith.constant 0 : index
    %c0_10 = arith.constant 0 : index
    %c0_11 = arith.constant 0 : index
    %9 = vector.load %arg6[%c0_9, %c0_10, %c0_11] : memref<2x8x128xf32, #tpu.memory_space<vmem>>, vector<1x8x128xf32>
    %10 = vector.shape_cast %9 : vector<1x8x128xf32> to vector<8x128xf32>
    %cst = arith.constant dense<0.000000e+00> : vector<8x128xf32>
    %11 = tpu.matmul %0, %1, %cst {dimension_numbers = #tpu.dot_dimension_numbers<[1], [0], [0], [1], [0, 0, 1, 1], [], []>} : vector<8x256xbf16>, vector<256x128xbf16>, vector<8x128xf32> -> vector<8x128xf32>
    %12 = arith.addf %11, %5 : vector<8x128xf32>
    %cst_12 = arith.constant 5.000000e-01 : f32
    %13 = vector.broadcast %cst_12 : f32 to vector<8x128xf32>
    %14 = arith.mulf %13, %12 : vector<8x128xf32>
    %15 = math.tanh %14 : vector<8x128xf32>
    %cst_13 = arith.constant 1.000000e+00 : f32
    %16 = vector.broadcast %cst_13 : f32 to vector<8x128xf32>
    %17 = arith.addf %15, %16 : vector<8x128xf32>
    %cst_14 = arith.constant 5.000000e-01 : f32
    %18 = vector.broadcast %cst_14 : f32 to vector<8x128xf32>
    %19 = arith.mulf %18, %17 : vector<8x128xf32>
    %20 = arith.cmpf olt, %10, %19 : vector<8x128xf32>
    %21 = arith.extui %20 : vector<8x128xi1> to vector<8x128xi32>
    %22 = arith.sitofp %21 : vector<8x128xi32> to vector<8x128xf32>
    %23 = arith.truncf %22 : vector<8x128xf32> to vector<8x128xbf16>
    %c0_15 = arith.constant 0 : index
    %c0_16 = arith.constant 0 : index
    %c0_17 = arith.constant 0 : index
    %24 = vector.load %arg7[%c0_15, %c0_16, %c0_17] : memref<1x8x256xf32, #tpu.memory_space<vmem>>, vector<1x8x256xf32>
    %25 = vector.shape_cast %24 : vector<1x8x256xf32> to vector<8x256xf32>
    %cst_18 = arith.constant dense<0.000000e+00> : vector<8x256xf32>
    %26 = tpu.matmul %23, %2, %cst_18 {dimension_numbers = #tpu.dot_dimension_numbers<[1], [0], [0], [1], [0, 0, 1, 1], [], []>} : vector<8x128xbf16>, vector<128x256xbf16>, vector<8x256xf32> -> vector<8x256xf32>
    %27 = arith.addf %26, %8 : vector<8x256xf32>
    %cst_19 = arith.constant 5.000000e-01 : f32
    %28 = vector.broadcast %cst_19 : f32 to vector<8x256xf32>
    %29 = arith.mulf %28, %27 : vector<8x256xf32>
    %30 = math.tanh %29 : vector<8x256xf32>
    %cst_20 = arith.constant 1.000000e+00 : f32
    %31 = vector.broadcast %cst_20 : f32 to vector<8x256xf32>
    %32 = arith.addf %30, %31 : vector<8x256xf32>
    %cst_21 = arith.constant 5.000000e-01 : f32
    %33 = vector.broadcast %cst_21 : f32 to vector<8x256xf32>
    %34 = arith.mulf %33, %32 : vector<8x256xf32>
    %35 = arith.cmpf olt, %25, %34 : vector<8x256xf32>
    %36 = arith.extui %35 : vector<8x256xi1> to vector<8x256xi32>
    %37 = arith.sitofp %36 : vector<8x256xi32> to vector<8x256xf32>
    %38 = arith.truncf %37 : vector<8x256xf32> to vector<8x256xbf16>
    %39 = arith.extf %38 : vector<8x256xbf16> to vector<8x256xf32>
    %c0_22 = arith.constant 0 : index
    %c0_23 = arith.constant 0 : index
    %40 = vector.load %arg8[%c0_22, %c0_23] : memref<8x256xf32, #tpu.memory_space<vmem>>, vector<8x256xf32>
    tpu.vector_store %arg8[%c0_22, %c0_23], %39 {strides = array<i32>} : memref<8x256xf32, #tpu.memory_space<vmem>>, vector<8x256xf32>,
    return
  }
  func.func @transform_0(%arg0: i32) -> (i32, i32) {
    %c0_i32 = arith.constant 0 : i32
    %c0_i32_0 = arith.constant 0 : i32
    return %arg0, %c0_i32 : i32, i32
  }
  func.func @transform_1(%arg0: i32) -> (i32, i32) {
    %c0_i32 = arith.constant 0 : i32
    %c0_i32_0 = arith.constant 0 : i32
    %c0_i32_1 = arith.constant 0 : i32
    return %c0_i32, %c0_i32_0 : i32, i32
  }
  func.func @transform_2(%arg0: i32) -> (i32, i32) {
    %c0_i32 = arith.constant 0 : i32
    %c0_i32_0 = arith.constant 0 : i32
    %c0_i32_1 = arith.constant 0 : i32
    return %c0_i32, %c0_i32_0 : i32, i32
  }
  func.func @transform_3(%arg0: i32) -> (i32, i32) {
    %c0_i32 = arith.constant 0 : i32
    %c0_i32_0 = arith.constant 0 : i32
    %c0_i32_1 = arith.constant 0 : i32
    return %c0_i32, %c0_i32_0 : i32, i32
  }
  func.func @transform_4(%arg0: i32) -> (i32, i32) {
    %c0_i32 = arith.constant 0 : i32
    %c0_i32_0 = arith.constant 0 : i32
    %c0_i32_1 = arith.constant 0 : i32
    return %c0_i32, %c0_i32_0 : i32, i32
  }
  func.func @transform_5(%arg0: i32) -> (i32, i32, i32) {
    %c0_i32 = arith.constant 0 : i32
    %c0_i32_0 = arith.constant 0 : i32
    %c0_i32_1 = arith.constant 0 : i32
    return %c0_i32, %arg0, %c0_i32_0 : i32, i32, i32
  }
  func.func @transform_6(%arg0: i32) -> (i32, i32, i32) {
    %c0_i32 = arith.constant 0 : i32
    %c0_i32_0 = arith.constant 0 : i32
    %c0_i32_1 = arith.constant 0 : i32
    return %c0_i32, %arg0, %c0_i32_0 : i32, i32, i32
  }
  func.func @transform_7(%arg0: i32) -> (i32, i32) {
    %c0_i32 = arith.constant 0 : i32
    %c0_i32_0 = arith.constant 0 : i32
    return %arg0, %c0_i32 : i32, i32
  }
}

</mosaic_0001>

<llo_original>
// kernel: tpu_custom_call.1
$region0: #{tpu_custom_call.1}
  #allocation0 [shape = 'u32[]', space=smem, size = 0x4, offset = 0x4, fixed_abs, tag = 'smem constant byte address 0x4 - core index']
  #allocation1 [shape = 'u32[144,128]{1,0:T(1,128)}', space=vmem, size = 0x12000, scoped, tag = 'internal scratch']
  %s0 = inlined_call_operand.hbm [shape: bf16[8,256], index: 0, kind: input, shape index: {}]
  %s1 = inlined_call_operand.hbm [shape: bf16[256,128], index: 1, kind: input, shape index: {}]
  %s2 = inlined_call_operand.hbm [shape: bf16[128,256], index: 2, kind: input, shape index: {}]
  %s3 = inlined_call_operand.hbm [shape: f32[1,128], index: 3, kind: input, shape index: {}]
  %s4 = inlined_call_operand.vmem [shape: f32[1,256], index: 4, kind: input, shape index: {}]
  %s5 = inlined_call_operand.vmem [shape: f32[2,8,128], index: 5, kind: input, shape index: {}]
  %s6 = inlined_call_operand.hbm [shape: f32[1,8,256], index: 6, kind: input, shape index: {}]
  %s7 = inlined_call_operand.hbm [shape: f32[8,256], index: 7, kind: output, shape index: {}]
  %s8 = sld [smem:[#allocation0]]
  $region58: #{tpu_custom_call.1} parent=0
    _
  %s10 = ssub.s32 1, %s8
  %s11 = scalar_select 0, %s10, %s8
  $region1: #{tpu_custom_call.1} parent=0
    #allocation2 [shape = 'u8[4096]{0}', space=vmem, size = 0x1000, scoped, tag = 'input window, operand 0, single buffered']
    #allocation3 [shape = 's32[1]{0}', space=sflag, size = 0x4, scoped, tag = 'scoped memory for tpu_custom_call.1']
    #allocation4 [shape = 's32[1]{0}', space=sflag, size = 0x4, scoped, tag = 'scoped memory for tpu_custom_call.1']
    #allocation5 [shape = 'u8[65536]{0}', space=vmem, size = 0x10000, scoped, tag = 'input window, operand 1, single buffered']
    #allocation6 [shape = 's32[1]{0}', space=sflag, size = 0x4, scoped, tag = 'scoped memory for tpu_custom_call.1']
    #allocation7 [shape = 'u8[65536]{0}', space=vmem, size = 0x10000, scoped, tag = 'input window, operand 2, single buffered']
    #allocation8 [shape = 'u8[512]{0}', space=vmem, size = 0x400, scoped, tag = 'input window, operand 3, single buffered']
    #allocation9 [shape = 's32[1]{0}', space=sflag, size = 0x4, scoped, tag = 'scoped memory for tpu_custom_call.1']
    #allocation10 [shape = 'u8[8192]{0}', space=vmem, size = 0x2000, scoped, tag = 'input window, operand 6, single buffered']
    #allocation11 [shape = 'u8[8192]{0}', space=vmem, size = 0x2000, scoped, tag = 'output window, operand 0, single buffered']
    %12 = vsyncpa [#allocation3], 0
    %13 = vsyncpa [#allocation6], 0
    %14 = vsyncpa [#allocation9], 0
    %15 = vsyncpa [#allocation4], 0
    // Predicated region
    $region2: #{tpu_custom_call.1} parent=1 // pred_check
      _
    $region3: #{tpu_custom_call.1} parent=1 // pred_check_branch
      %17 = sbr.rel (0) target = $region5
    $region4: #{tpu_custom_call.1} parent=1 // pred_region
      %s19 = ssub.s32 128, 128
      %20 = vsyncadd [#allocation3], %s19
      %s22 = sshll.u32 [#allocation2], 4
      %s23 = int_to_ptr.vmem [resolvable:$true] %s22
      %25 = dma.hbm_to_vmem [thread:$0]  %s0, 128, %s23, [#allocation3]
    $region5: #{tpu_custom_call.1} parent=1 // pred_fallthru
      _
    // Predicated region
    $region6: #{tpu_custom_call.1} parent=1 // pred_check
      _
    $region7: #{tpu_custom_call.1} parent=1 // pred_check_branch
      %27 = sbr.rel (0) target = $region9
    $region8: #{tpu_custom_call.1} parent=1 // pred_region
      %s29 = ssub.s32 2048, 2048
      %30 = vsyncadd [#allocation6], %s29
      %s31 = sshll.u32 [#allocation5], 4
      %s32 = int_to_ptr.vmem [resolvable:$true] %s31
      %37 = dma.hbm_to_vmem [thread:$0]  %s1, 2048, %s32, [#allocation6], 64, 64, 4
    $region9: #{tpu_custom_call.1} parent=1 // pred_fallthru
      _
    // Predicated region
    $region10: #{tpu_custom_call.1} parent=1 // pred_check
      _
    $region11: #{tpu_custom_call.1} parent=1 // pred_check_branch
      %39 = sbr.rel (0) target = $region13
    $region12: #{tpu_custom_call.1} parent=1 // pred_region
      %s41 = ssub.s32 2048, 2048
      %42 = vsyncadd [#allocation6], %s41
      %s43 = sshll.u32 [#allocation7], 4
      %s44 = int_to_ptr.vmem [resolvable:$true] %s43
      %49 = dma.hbm_to_vmem [thread:$0]  %s2, 2048, %s44, [#allocation6], 128, 128, 8
    $region13: #{tpu_custom_call.1} parent=1 // pred_fallthru
      _
    // Predicated region
    $region14: #{tpu_custom_call.1} parent=1 // pred_check
      _
    $region15: #{tpu_custom_call.1} parent=1 // pred_check_branch
      %51 = sbr.rel (0) target = $region17
    $region16: #{tpu_custom_call.1} parent=1 // pred_region
      %s53 = ssub.s32 16, 16
      %54 = vsyncadd [#allocation9], %s53
      %s56 = sshll.u32 [#allocation8], 4
      %s57 = int_to_ptr.vmem [resolvable:$true] %s56
      %59 = dma.hbm_to_vmem [thread:$0]  %s3, 16, %s57, [#allocation9]
    $region17: #{tpu_custom_call.1} parent=1 // pred_fallthru
      _
    // Predicated region
    $region18: #{tpu_custom_call.1} parent=1 // pred_check
      _
    $region19: #{tpu_custom_call.1} parent=1 // pred_check_branch
      %61 = sbr.rel (0) target = $region21
    $region20: #{tpu_custom_call.1} parent=1 // pred_region
      _
    $region21: #{tpu_custom_call.1} parent=1 // pred_fallthru
      _
    // Predicated region
    $region22: #{tpu_custom_call.1} parent=1 // pred_check
      _
    $region23: #{tpu_custom_call.1} parent=1 // pred_check_branch
      %63 = sbr.rel (0) target = $region25
    $region24: #{tpu_custom_call.1} parent=1 // pred_region
      _
    $region25: #{tpu_custom_call.1} parent=1 // pred_fallthru
      _
    // Predicated region
    $region26: #{tpu_custom_call.1} parent=1 // pred_check
      _
    $region27: #{tpu_custom_call.1} parent=1 // pred_check_branch
      %65 = sbr.rel (0) target = $region29
    $region28: #{tpu_custom_call.1} parent=1 // pred_region
      %s67 = ssub.s32 256, 256
      %68 = vsyncadd [#allocation9], %s67
      %s70 = sshll.u32 [#allocation10], 4
      %s71 = int_to_ptr.vmem [resolvable:$true] %s70
      %73 = dma.hbm_to_vmem [thread:$0]  %s6, 256, %s71, [#allocation9]
    $region29: #{tpu_custom_call.1} parent=1 // pred_fallthru
      _
    // Predicated region
    $region30: #{tpu_custom_call.1} parent=1 // pred_check
      _
    $region31: #{tpu_custom_call.1} parent=1 // pred_check_branch
      %75 = sbr.rel (0) target = $region33
    $region32: #{tpu_custom_call.1} parent=1 // pred_region
      %76 = dma.done [#allocation3], 128
    $region33: #{tpu_custom_call.1} parent=1 // pred_fallthru
      _
    // Predicated region
    $region34: #{tpu_custom_call.1} parent=1 // pred_check
      _
    $region35: #{tpu_custom_call.1} parent=1 // pred_check_branch
      %78 = sbr.rel (0) target = $region37
    $region36: #{tpu_custom_call.1} parent=1 // pred_region
      %79 = dma.done [#allocation6], 2048
    $region37: #{tpu_custom_call.1} parent=1 // pred_fallthru
      _
    // Predicated region
    $region38: #{tpu_custom_call.1} parent=1 // pred_check
      _
    $region39: #{tpu_custom_call.1} parent=1 // pred_check_branch
      %81 = sbr.rel (0) target = $region41
    $region40: #{tpu_custom_call.1} parent=1 // pred_region
      %82 = dma.done [#allocation6], 2048
    $region41: #{tpu_custom_call.1} parent=1 // pred_fallthru
      _
    // Predicated region
    $region42: #{tpu_custom_call.1} parent=1 // pred_check
      _
    $region43: #{tpu_custom_call.1} parent=1 // pred_check_branch
      %84 = sbr.rel (0) target = $region45
    $region44: #{tpu_custom_call.1} parent=1 // pred_region
      %85 = dma.done [#allocation9], 16
    $region45: #{tpu_custom_call.1} parent=1 // pred_fallthru
      _
    // Predicated region
    $region46: #{tpu_custom_call.1} parent=1 // pred_check
      _
    $region47: #{tpu_custom_call.1} parent=1 // pred_check_branch
      %87 = sbr.rel (0) target = $region49
    $region48: #{tpu_custom_call.1} parent=1 // pred_region
      %88 = dma.done [#allocation9], 256
    $region49: #{tpu_custom_call.1} parent=1 // pred_fallthru
      _
    %v90 = vld [vmem:[#allocation2] sm:$0xff]
    %v91 = vld [vmem:[#allocation5] sm:$0xf]
    %v92 = vld [vmem:[#allocation5 + $0x4] sm:$0xf]
    %v93 = vld [vmem:[#allocation5 + $0x8] sm:$0xf]
    %v94 = vld [vmem:[#allocation5 + $0xc] sm:$0xf]
    %v95 = vld [vmem:[#allocation5 + $0x10] sm:$0xf]
    %v96 = vld [vmem:[#allocation5 + $0x14] sm:$0xf]
    %v97 = vld [vmem:[#allocation5 + $0x18] sm:$0xf]
    %v98 = vld [vmem:[#allocation5 + $0x1c] sm:$0xf]
    %v99 = vld [vmem:[#allocation5 + $0x20] sm:$0xf]
    %v100 = vld [vmem:[#allocation5 + $0x24] sm:$0xf]
    %v101 = vld [vmem:[#allocation5 + $0x28] sm:$0xf]
    %v102 = vld [vmem:[#allocation5 + $0x2c] sm:$0xf]
    %v103 = vld [vmem:[#allocation5 + $0x30] sm:$0xf]
    %v104 = vld [vmem:[#allocation5 + $0x34] sm:$0xf]
    %v105 = vld [vmem:[#allocation5 + $0x38] sm:$0xf]
    %v106 = vld [vmem:[#allocation5 + $0x3c] sm:$0xf]
    %v107 = vld [vmem:[#allocation5 + $0x40] sm:$0xf]
    %v108 = vld [vmem:[#allocation5 + $0x44] sm:$0xf]
    %v109 = vld [vmem:[#allocation5 + $0x48] sm:$0xf]
    %v110 = vld [vmem:[#allocation5 + $0x4c] sm:$0xf]
    %v111 = vld [vmem:[#allocation5 + $0x50] sm:$0xf]
    %v112 = vld [vmem:[#allocation5 + $0x54] sm:$0xf]
    %v113 = vld [vmem:[#allocation5 + $0x58] sm:$0xf]
    %v114 = vld [vmem:[#allocation5 + $0x5c] sm:$0xf]
    %v115 = vld [vmem:[#allocation5 + $0x60] sm:$0xf]
    %v116 = vld [vmem:[#allocation5 + $0x64] sm:$0xf]
    %v117 = vld [vmem:[#allocation5 + $0x68] sm:$0xf]
    %v118 = vld [vmem:[#allocation5 + $0x6c] sm:$0xf]
    %v119 = vld [vmem:[#allocation5 + $0x70] sm:$0xf]
    %v120 = vld [vmem:[#allocation5 + $0x74] sm:$0xf]
    %v121 = vld [vmem:[#allocation5 + $0x78] sm:$0xf]
    %v122 = vld [vmem:[#allocation5 + $0x7c] sm:$0xf]
    %v123 = vld [vmem:[#allocation7] sm:$0xff]
    %v124 = vld [vmem:[#allocation7 + $0x8] sm:$0xff]
    %v125 = vld [vmem:[#allocation7 + $0x10] sm:$0xff]
    %v126 = vld [vmem:[#allocation7 + $0x18] sm:$0xff]
    %v127 = vld [vmem:[#allocation7 + $0x20] sm:$0xff]
    %v128 = vld [vmem:[#allocation7 + $0x28] sm:$0xff]
    %v129 = vld [vmem:[#allocation7 + $0x30] sm:$0xff]
    %v130 = vld [vmem:[#allocation7 + $0x38] sm:$0xff]
    %v131 = vld [vmem:[#allocation7 + $0x40] sm:$0xff]
    %v132 = vld [vmem:[#allocation7 + $0x48] sm:$0xff]
    %v133 = vld [vmem:[#allocation7 + $0x50] sm:$0xff]
    %v134 = vld [vmem:[#allocation7 + $0x58] sm:$0xff]
    %v135 = vld [vmem:[#allocation7 + $0x60] sm:$0xff]
    %v136 = vld [vmem:[#allocation7 + $0x68] sm:$0xff]
    %v137 = vld [vmem:[#allocation7 + $0x70] sm:$0xff]
    %v138 = vld [vmem:[#allocation7 + $0x78] sm:$0xff]
    %v139 = vld [vmem:[#allocation8] sm:$0x1]
    %v141 = vlaneseq
    %v142 = vshrl.u32 %v141, 7
    %v143 = vsub.s32 0, %v142
    %v144 = vrot.slane %v139, %v143
    %v146 = vld [vmem:[%s4] sm:$0x3]
    %v148 = vlaneseq
    %v149 = vshrl.u32 %v148, 7
    %v150 = vsub.s32 0, %v149
    %v151 = vrot.slane %v146, %v150
    %v152 = vlaneseq
    %v153 = vshrl.u32 %v152, 7
    %v154 = vsub.s32 1, %v153
    %v155 = vrot.slane %v146, %v154
    %v158 = vld [vmem:[%s5] sm:$0xff]
    %v160 = vunpack.c.l.b16 %v90
    %v161 = vunpack.c.h.b16 %v90
    %v162 = vpack.c.b16 %v160, %v160
    %v163 = vpack.c.b16 %v161, %v161
    %v198 = vunpack.c.l.b16 %v91
    %v199 = vunpack.c.l.b16 %v92
    %v200 = vunpack.c.l.b16 %v93
    %v201 = vunpack.c.l.b16 %v94
    %v202 = vunpack.c.l.b16 %v95
    %v203 = vunpack.c.l.b16 %v96
    %v204 = vunpack.c.l.b16 %v97
    %v205 = vunpack.c.l.b16 %v98
    %v206 = vunpack.c.l.b16 %v99
    %v207 = vunpack.c.l.b16 %v100
    %v208 = vunpack.c.l.b16 %v101
    %v209 = vunpack.c.l.b16 %v102
    %v210 = vunpack.c.l.b16 %v103
    %v211 = vunpack.c.l.b16 %v104
    %v212 = vunpack.c.l.b16 %v105
    %v213 = vunpack.c.l.b16 %v106
    %v214 = vunpack.c.l.b16 %v107
    %v215 = vunpack.c.l.b16 %v108
    %v216 = vunpack.c.l.b16 %v109
    %v217 = vunpack.c.l.b16 %v110
    %v218 = vunpack.c.l.b16 %v111
    %v219 = vunpack.c.l.b16 %v112
    %v220 = vunpack.c.l.b16 %v113
    %v221 = vunpack.c.l.b16 %v114
    %v222 = vunpack.c.l.b16 %v115
    %v223 = vunpack.c.l.b16 %v116
    %v224 = vunpack.c.l.b16 %v117
    %v225 = vunpack.c.l.b16 %v118
    %v226 = vunpack.c.l.b16 %v119
    %v227 = vunpack.c.l.b16 %v120
    %v228 = vunpack.c.l.b16 %v121
    %v229 = vunpack.c.l.b16 %v122
    %v230 = vpack.c.b16 %v199, %v198
    %v231 = vpack.c.b16 %v201, %v200
    %v232 = vpack.c.b16 %v203, %v202
    %v233 = vpack.c.b16 %v205, %v204
    %v234 = vpack.c.b16 %v207, %v206
    %v235 = vpack.c.b16 %v209, %v208
    %v236 = vpack.c.b16 %v211, %v210
    %v237 = vpack.c.b16 %v213, %v212
    %v238 = vpack.c.b16 %v215, %v214
    %v239 = vpack.c.b16 %v217, %v216
    %v240 = vpack.c.b16 %v219, %v218
    %v241 = vpack.c.b16 %v221, %v220
    %v242 = vpack.c.b16 %v223, %v222
    %v243 = vpack.c.b16 %v225, %v224
    %v244 = vpack.c.b16 %v227, %v226
    %v245 = vpack.c.b16 %v229, %v228
    %262 = vmatprep.subr.bf16.mxu0 0
    %263 = vmatpush1.bf16.msra.mxu0 %v230
    %264 = vmatprep.subr.bf16.mxu0 0
    %265 = vmatpush1.bf16.msra.mxu0 %v231
    %266 = vmatprep.subr.bf16.mxu0 0
    %267 = vmatpush1.bf16.msra.mxu0 %v232
    %268 = vmatprep.subr.bf16.mxu0 0
    %269 = vmatpush1.bf16.msra.mxu0 %v233
    %270 = vmatprep.subr.bf16.mxu0 0
    %271 = vmatpush1.bf16.msra.mxu0 %v234
    %272 = vmatprep.subr.bf16.mxu0 0
    %273 = vmatpush1.bf16.msra.mxu0 %v235
    %274 = vmatprep.subr.bf16.mxu0 0
    %275 = vmatpush1.bf16.msra.mxu0 %v236
    %276 = vmatprep.subr.bf16.mxu0 0
    %277 = vmatpush1.bf16.msra.mxu0 %v237
    %278 = vmatprep.subr.bf16.mxu0 0
    %279 = vmatpush1.bf16.msra.mxu0 %v238
    %280 = vmatprep.subr.bf16.mxu0 0
    %281 = vmatpush1.bf16.msra.mxu0 %v239
    %282 = vmatprep.subr.bf16.mxu0 0
    %283 = vmatpush1.bf16.msra.mxu0 %v240
    %284 = vmatprep.subr.bf16.mxu0 0
    %285 = vmatpush1.bf16.msra.mxu0 %v241
    %286 = vmatprep.subr.bf16.mxu0 0
    %287 = vmatpush1.bf16.msra.mxu0 %v242
    %288 = vmatprep.subr.bf16.mxu0 0
    %289 = vmatpush1.bf16.msra.mxu0 %v243
    %290 = vmatprep.subr.bf16.mxu0 0
    %291 = vmatpush1.bf16.msra.mxu0 %v244
    %292 = vmatprep.subr.bf16.mxu0 0
    %293 = vmatpush1.bf16.msra.mxu0 %v245
    %294 = vmatprep.mubr.bf16.mxu0 %v163
    %295 = vmatmul.mubr.bf16.gmra.mrb[0].mxu0 %v162
    %v296 = vpop.f32.mrb[0].mxu0
    %v297 = vadd.f32 %v144, %v296
    %v298 = vpop.f32.mrb[0].mxu0
    %v299 = vpop.f32.mrb[0].mxu0
    %v300 = vpop.f32.mrb[0].mxu0
    %301 = vdwg.mxu0
    %v302 = vmul.f32 %v297, 0.5
    %v303 = vtanh.pop %v302
    %v304 = vadd.f32 %v303, 1.0
    %v305 = vmul.f32 %v304, 0.5
    %vm306 = vcmp.lt.f32.partialorder %v158, %v305
    %v307 = vsel %vm306, 1, 0
    %v308 = vcvt.s32.f32 %v307
    %v309 = vpack.c.bf16 %v308, %v308
    %v310 = vld [vmem:[#allocation10] sm:$0xff]
    %v311 = vld [vmem:[#allocation10 + $0x8] sm:$0xff]
    %v328 = vunpack.c.l.b16 %v123
    %v329 = vunpack.c.h.b16 %v123
    %v330 = vunpack.c.l.b16 %v124
    %v331 = vunpack.c.h.b16 %v124
    %v332 = vunpack.c.l.b16 %v125
    %v333 = vunpack.c.h.b16 %v125
    %v334 = vunpack.c.l.b16 %v126
    %v335 = vunpack.c.h.b16 %v126
    %v336 = vunpack.c.l.b16 %v127
    %v337 = vunpack.c.h.b16 %v127
    %v338 = vunpack.c.l.b16 %v128
    %v339 = vunpack.c.h.b16 %v128
    %v340 = vunpack.c.l.b16 %v129
    %v341 = vunpack.c.h.b16 %v129
    %v342 = vunpack.c.l.b16 %v130
    %v343 = vunpack.c.h.b16 %v130
    %v344 = vunpack.c.l.b16 %v131
    %v345 = vunpack.c.h.b16 %v131
    %v346 = vunpack.c.l.b16 %v132
    %v347 = vunpack.c.h.b16 %v132
    %v348 = vunpack.c.l.b16 %v133
    %v349 = vunpack.c.h.b16 %v133
    %v350 = vunpack.c.l.b16 %v134
    %v351 = vunpack.c.h.b16 %v134
    %v352 = vunpack.c.l.b16 %v135
    %v353 = vunpack.c.h.b16 %v135
    %v354 = vunpack.c.l.b16 %v136
    %v355 = vunpack.c.h.b16 %v136
    %v356 = vunpack.c.l.b16 %v137
    %v357 = vunpack.c.h.b16 %v137
    %v358 = vunpack.c.l.b16 %v138
    %v359 = vunpack.c.h.b16 %v138
    %v360 = vpack.c.b16 %v330, %v328
    %v361 = vpack.c.b16 %v331, %v329
    %v362 = vpack.c.b16 %v334, %v332
    %v363 = vpack.c.b16 %v335, %v333
    %v364 = vpack.c.b16 %v338, %v336
    %v365 = vpack.c.b16 %v339, %v337
    %v366 = vpack.c.b16 %v342, %v340
    %v367 = vpack.c.b16 %v343, %v341
    %v368 = vpack.c.b16 %v346, %v344
    %v369 = vpack.c.b16 %v347, %v345
    %v370 = vpack.c.b16 %v350, %v348
    %v371 = vpack.c.b16 %v351, %v349
    %v372 = vpack.c.b16 %v354, %v352
    %v373 = vpack.c.b16 %v355, %v353
    %v374 = vpack.c.b16 %v358, %v356
    %v375 = vpack.c.b16 %v359, %v357
    %392 = vmatprep.subr.bf16.mxu0 %v361
    %393 = vmatpush1.bf16.msra.mxu0 %v360
    %394 = vmatprep.subr.bf16.mxu0 %v363
    %395 = vmatpush1.bf16.msra.mxu0 %v362
    %396 = vmatprep.subr.bf16.mxu0 %v365
    %397 = vmatpush1.bf16.msra.mxu0 %v364
    %398 = vmatprep.subr.bf16.mxu0 %v367
    %399 = vmatpush1.bf16.msra.mxu0 %v366
    %400 = vmatprep.subr.bf16.mxu0 %v369
    %401 = vmatpush1.bf16.msra.mxu0 %v368
    %402 = vmatprep.subr.bf16.mxu0 %v371
    %403 = vmatpush1.bf16.msra.mxu0 %v370
    %404 = vmatprep.subr.bf16.mxu0 %v373
    %405 = vmatpush1.bf16.msra.mxu0 %v372
    %406 = vmatprep.subr.bf16.mxu0 %v375
    %407 = vmatpush1.bf16.msra.mxu0 %v374
    %408 = vmatprep.subr.bf16.mxu0 0
    %409 = vmatpush1.bf16.msra.mxu0 0
    %410 = vmatprep.subr.bf16.mxu0 0
    %411 = vmatpush1.bf16.msra.mxu0 0
    %412 = vmatprep.subr.bf16.mxu0 0
    %413 = vmatpush1.bf16.msra.mxu0 0
    %414 = vmatprep.subr.bf16.mxu0 0
    %415 = vmatpush1.bf16.msra.mxu0 0
    %416 = vmatprep.subr.bf16.mxu0 0
    %417 = vmatpush1.bf16.msra.mxu0 0
    %418 = vmatprep.subr.bf16.mxu0 0
    %419 = vmatpush1.bf16.msra.mxu0 0
    %420 = vmatprep.subr.bf16.mxu0 0
    %421 = vmatpush1.bf16.msra.mxu0 0
    %422 = vmatprep.subr.bf16.mxu0 0
    %423 = vmatpush1.bf16.msra.mxu0 0
    %424 = vmatprep.mubr.bf16.mxu0 0
    %425 = vmatmul.mubr.bf16.gmra.mrb[0].mxu0 %v309
    %v426 = vpop.f32.mrb[0].mxu0
    %v427 = vadd.f32 %v151, %v426
    %v428 = vpop.f32.mrb[0].mxu0
    %v429 = vadd.f32 %v155, %v428
    %v430 = vpop.f32.mrb[0].mxu0
    %v431 = vpop.f32.mrb[0].mxu0
    %432 = vdwg.mxu0
    %v433 = vmul.f32 %v427, 0.5
    %v434 = vmul.f32 %v429, 0.5
    %v435 = vtanh.pop %v433
    %v436 = vtanh.pop %v434
    %v437 = vadd.f32 %v435, 1.0
    %v438 = vadd.f32 %v436, 1.0
    %v439 = vmul.f32 %v437, 0.5
    %v440 = vmul.f32 %v438, 0.5
    %vm441 = vcmp.lt.f32.partialorder %v310, %v439
    %vm442 = vcmp.lt.f32.partialorder %v311, %v440
    %v443 = vsel %vm441, 1, 0
    %v444 = vsel %vm442, 1, 0
    %v445 = vcvt.s32.f32 %v443
    %v446 = vcvt.s32.f32 %v444
    %v447 = vpack.c.bf16 %v445, %v445
    %v448 = vpack.c.bf16 %v446, %v446
    %v449 = vunpack.c.l.bf16 %v447
    %v450 = vunpack.c.l.bf16 %v448
    %451 = vst [vmem:[#allocation11] sm:$0xff] %v449
    %452 = vst [vmem:[#allocation11 + $0x8] sm:$0xff] %v450
    // Predicated region
    $region50: #{tpu_custom_call.1} parent=1 // pred_check
      _
    $region51: #{tpu_custom_call.1} parent=1 // pred_check_branch
      %454 = sbr.rel (0) target = $region53
    $region52: #{tpu_custom_call.1} parent=1 // pred_region
      %s456 = ssub.s32 256, 256
      %457 = vsyncadd [#allocation4], %s456
      %s459 = sshll.u32 [#allocation11], 4
      %s460 = int_to_ptr.vmem [resolvable:$true] %s459
      %462 = dma.vmem_to_hbm [thread:$0]  %s460, 256, %s7, [#allocation4]
    $region53: #{tpu_custom_call.1} parent=1 // pred_fallthru
      _
    // Predicated region
    $region54: #{tpu_custom_call.1} parent=1 // pred_check
      _
    $region55: #{tpu_custom_call.1} parent=1 // pred_check_branch
      %464 = sbr.rel (0) target = $region57
    $region56: #{tpu_custom_call.1} parent=1 // pred_region
      %465 = dma.done [#allocation4], 256
    $region57: #{tpu_custom_call.1} parent=1 // pred_fallthru
      _
    %466 = vsyncpa [#allocation3], 1
    %467 = vsyncpa [#allocation6], 1
    %468 = vsyncpa [#allocation9], 1
    %469 = vsyncpa [#allocation4], 1

</llo_original>
